<compile_context>
chip_gen: v7x
topology: tpu7x:2x2x1
jax: 0.10.0
libtpu: 0.0.40
codegen_flags: <defaults>
</compile_context>

<pallas_src>
import functools

import numpy as np

import jax
import jax.numpy as jnp
from jax.experimental import pallas as pl
from jax.experimental.pallas import tpu as pltpu


def _round_up(v, m):
    return (v + m - 1) // m * m


# ----------------------------- pass 1: difference logits -----------------------------

def _logit_kernel(x_ref, wd_ref, lp_ref):
    tn = wd_ref.shape[1]
    # d = x @ (W1 - W0) + (b1 - b0)  (bias folded in via ones column / bias row)
    d = jnp.dot(x_ref[...], wd_ref[...], preferred_element_type=jnp.float32)
    # Numerically stable softplus.
    sp = jnp.maximum(d, 0.0) + jnp.log1p(jnp.exp(-jnp.abs(d)))
    # LP layout: lanes [0:tn] = -softplus(d) (pairs with S0+S1), [tn:2tn] = d (pairs with S1).
    # Cast each half individually before storing (no f32 concatenate / extra copies).
    lp_ref[:, :tn] = (-sp).astype(lp_ref.dtype)
    lp_ref[:, tn:] = d.astype(lp_ref.dtype)


# ----------------------------- pass 2: selection matmul ------------------------------

def _select_kernel(j_tbl_ref, k_tbl_ref, lp_ref, scat_ref, out_ref, acc_ref, *,
                   return_log):
    t = pl.program_id(1)
    nt = pl.num_programs(1)
    j_cur = j_tbl_ref[t]
    # Tile list is sorted by class tile j; a new class tile starts a fresh accumulator
    # and the last node tile of each class tile finalizes the output block.
    is_first = jnp.logical_or(t == 0, j_tbl_ref[jnp.maximum(t - 1, 0)] != j_cur)
    is_last = jnp.logical_or(t == nt - 1, j_tbl_ref[jnp.minimum(t + 1, nt - 1)] != j_cur)

    @pl.when(is_first)
    def _init():
        acc_ref[...] = jnp.zeros_like(acc_ref)

    # log_out contribution: (-sp) @ (S0+S1) + d @ S1, fused as one 2*tn-deep contraction.
    acc_ref[...] += jnp.dot(lp_ref[...], scat_ref[...],
                            preferred_element_type=jnp.float32)

    @pl.when(is_last)
    def _finalize():
        r = acc_ref[...]
        if not return_log:
            r = jnp.exp(r)
        out_ref[...] = r.astype(out_ref.dtype)


# ----------------------------- host-side preparation ---------------------------------

def prepare_h_softmax(thetas_w, thetas_b, huffman_coding, *, tn=256, tc=512,
                      e_align=256, compute_dtype=jnp.bfloat16):
    """Per-tree / per-parameter preprocessing (numpy, done once, NOT per forward call).

    thetas_w : (N, 2, E)  per-internal-node nn.Linear weights
    thetas_b : (N, 2)     per-internal-node nn.Linear biases
    huffman_coding : list (len C) of paths [(node, branch), ...]
    """
    thetas_w = np.asarray(thetas_w, np.float32)
    thetas_b = np.asarray(thetas_b, np.float32)
    N, _, E = thetas_w.shape
    C = len(huffman_coding)
    if N == 0 or C == 0:
        raise ValueError("degenerate tree (no internal nodes / classes) not supported")
    # TODO(synk): the original module builds the Huffman tree / codings from word
    # frequencies via get_huffman_tree; that is host-side Python preprocessing, so the
    # caller supplies the codings directly.

    tn = min(tn, _round_up(N, 128))
    tc = min(tc, _round_up(C, 128))
    Np = _round_up(N, tn)
    Cp = _round_up(C, tc)
    kt, jt = Np // tn, Cp // tc
    Ep = _round_up(E + 1, e_align)          # padded contraction dim (full MXU fill)

    # Difference-logit weights with the bias folded in as row E, zero-padded (exact).
    wd_aug = np.zeros((Ep, Np), np.float32)
    wd_aug[:E, :N] = (thetas_w[:, 1, :] - thetas_w[:, 0, :]).T
    wd_aug[E, :N] = thetas_b[:, 1] - thetas_b[:, 0]

    # Selection matrices: ssum = S0 + S1 (node on path), s1 (node on path, branch 1).
    ssum = np.zeros((Np, Cp), np.float32)
    s1 = np.zeros((Np, Cp), np.float32)
    for c, code in enumerate(huffman_coding):
        for node, branch in code:
            ssum[node, c] = 1.0
            if branch == 1:
                s1[node, c] = 1.0
    # Per-node-tile stacked selection matrix: rows [0:tn] = (S0+S1)_k, [tn:2tn] = S1_k.
    scat = np.concatenate([ssum.reshape(kt, tn, Cp), s1.reshape(kt, tn, Cp)], axis=1)

    # Compacted nonzero-tile list (paths are O(log C) => most (k, j) blocks are empty
    # at realistic FastText vocab sizes).  Sorted by class tile j, then node tile k.
    occ = ssum.reshape(kt, tn, jt, tc).sum(axis=(1, 3)) > 0       # (kt, jt)
    k_idx, j_idx = np.nonzero(occ)
    order = np.lexsort((k_idx, j_idx))
    j_tbl = np.ascontiguousarray(j_idx[order].astype(np.int32))
    k_tbl = np.ascontiguousarray(k_idx[order].astype(np.int32))
    # TODO(synk): at vocab scale (T > ~64K) pack j/k into one int32 per entry to stay
    # inside SMEM; unnecessary for typical FastText trees and for this demo.

    return dict(
        wd_aug=jnp.asarray(wd_aug, compute_dtype),
        scat=jnp.asarray(scat, compute_dtype),
        j_tbl=jnp.asarray(j_tbl),
        k_tbl=jnp.asarray(k_tbl),
        compute_dtype=compute_dtype,
        dims=dict(N=N, C=C, E=E, Np=Np, Cp=Cp, Ep=Ep, tn=tn, tc=tc, kt=kt, jt=jt),
    )


# ----------------------------- forward call -------------------------------------------

def h_softmax(x, tables, *, tb=None, return_log=False, out_dtype=jnp.float32,
              vmem_limit_bytes=64 * 1024 * 1024, scat_buffer_count=2):
    """Hierarchical-softmax forward.  x: (B, E).  Returns (B, C) probabilities
    (or log-probabilities if return_log=True)."""
    d = tables["dims"]
    N, C, E = d["N"], d["C"], d["E"]
    Np, Cp, Ep = d["Np"], d["Cp"], d["Ep"]
    tn, tc, kt = d["tn"], d["tc"], d["kt"]
    cdt = tables["compute_dtype"]
    cdt_bytes = jnp.dtype(cdt).itemsize

    B, Ex = x.shape
    assert Ex == E, (Ex, E)
    if tb is None:
        # multiple of 16 for bf16 sublane packing; grow tb to keep it_ small so the
        # scat stream is not re-fetched per batch tile (keep tb*tn <= ~32K f32).
        tb = min(_round_up(B, 16), 128)
    Bp = _round_up(B, tb)
    it_ = Bp // tb

    # x_aug = [x | 1 | 0-pad]  (ones column matches the folded bias row of wd_aug).
    f32 = jnp.float32
    x_aug = jnp.concatenate([x.astype(f32), jnp.ones((B, 1), f32)], axis=1)
    x_aug = jnp.pad(x_aug, ((0, Bp - B), (0, Ep - (E + 1)))).astype(cdt)       # (Bp, Ep)

    # ---------------- pass 1: LP = [-softplus(d) | d], one tile per (i, k) ----------------
    cost1 = pl.CostEstimate(
        flops=int(2 * Bp * Ep * Np),
        transcendentals=int(2 * Bp * Np),
        bytes_accessed=int((x_aug.size + it_ * tables["wd_aug"].size
                            + kt * Bp * 2 * tn) * cdt_bytes),
    )
    lp = pl.pallas_call(
        _logit_kernel,
        out_shape=jax.ShapeDtypeStruct((kt, Bp, 2 * tn), cdt),
        grid_spec=pltpu.PrefetchScalarGridSpec(
            num_scalar_prefetch=0,
            grid=(it_, kt),
            in_specs=[
                pl.BlockSpec((tb, Ep), lambda i, k: (i, 0)),
                pl.BlockSpec((Ep, tn), lambda i, k: (0, k)),
            ],
            out_specs=pl.BlockSpec((None, tb, 2 * tn), lambda i, k: (k, i, 0)),
        ),
        compiler_params=pltpu.CompilerParams(
            dimension_semantics=("parallel", "parallel"),
            vmem_limit_bytes=vmem_limit_bytes,
        ),
        cost_estimate=cost1,
    )(x_aug, tables["wd_aug"])

    # ---------------- pass 2: sparse-tile selection matmul ----------------
    j_tbl, k_tbl, scat = tables["j_tbl"], tables["k_tbl"], tables["scat"]
    T = int(j_tbl.shape[0])

    scat_spec_kwargs = {}
    if scat_buffer_count != 2:
        # Deeper buffering hides per-block DMA issue latency for the skippy/irregular
        # access pattern of the compacted tile list (see review feedback).
        scat_spec_kwargs["pipeline_mode"] = pl.Buffered(scat_buffer_count)

    out_bytes = jnp.dtype(out_dtype).itemsize
    cost2 = pl.CostEstimate(
        flops=int(2 * tb * (2 * tn) * tc * it_ * T),
        transcendentals=0 if return_log else int(Bp * Cp),
        bytes_accessed=int((tb * 2 * tn + 2 * tn * tc) * cdt_bytes * it_ * T
                           + Bp * Cp * out_bytes + 2 * T * 4),
    )
    out = pl.pallas_call(
        functools.partial(_select_kernel, return_log=return_log),
        out_shape=jax.ShapeDtypeStruct((Bp, Cp), out_dtype),
        grid_spec=pltpu.PrefetchScalarGridSpec(
            num_scalar_prefetch=2,
            grid=(it_, T),                      # batch tiles outer (parallel), tile list inner
            in_specs=[
                pl.BlockSpec((None, tb, 2 * tn),
                             lambda i, t, jr, kr: (kr[t], i, 0)),
                pl.BlockSpec((None, 2 * tn, tc),
                             lambda i, t, jr, kr: (kr[t], 0, jr[t]),
                             **scat_spec_kwargs),
            ],
            out_specs=pl.BlockSpec((tb, tc), lambda i, t, jr, kr: (i, jr[t])),
            scratch_shapes=[pltpu.VMEM((tb, tc), jnp.float32)],
        ),
        compiler_params=pltpu.CompilerParams(
            dimension_semantics=("parallel", "arbitrary"),
            vmem_limit_bytes=vmem_limit_bytes,
        ),
        cost_estimate=cost2,
    )(j_tbl, k_tbl, lp, scat)

    return out[:B, :C]


# ----------------------------- reference & demo helpers -------------------------------

def _balanced_prefix_codes(n_classes):
    """Depth-first-numbered balanced prefix-code tree (valid stand-in for a Huffman tree)."""
    codes = [None] * n_classes
    counter = [0]

    def assign(lo, hi, prefix):
        if hi - lo == 1:
            codes[lo] = prefix
            return
        node = counter[0]
        counter[0] += 1
        mid = (lo + hi) // 2
        assign(lo, mid, prefix + [(node, 0)])
        assign(mid, hi, prefix + [(node, 1)])

    assign(0, n_classes, [])
    return codes, counter[0]


def reference_h_softmax(x, thetas_w, thetas_b, huffman_coding):
    """NumPy transcription of the PyTorch forward (loop over codings / path nodes)."""
    x = np.asarray(x, np.float64)
    tw = np.asarray(thetas_w, np.float64)
    tbi = np.asarray(thetas_b, np.float64)
    outs = []
    for code in huffman_coding:
        cp = np.ones((x.shape[0], 1))
        for node, branch in code:
            logits = x @ tw[node].T + tbi[node]                 # nn.Linear(embedding, 2)
            logits = logits - logits.max(axis=1, keepdims=True)
            p = np.exp(logits)
            p = p / p.sum(axis=1, keepdims=True)                # Softmax(dim=1)
            cp = p[:, branch][:, None] * cp                     # .t()[branch].unsqueeze(1) * cp
        outs.append(cp)
    return np.concatenate(outs, axis=1)


def _run_case(name, key, huffman_coding, n_nodes, batch, embedding, **kw):
    n_classes = len(huffman_coding)
    kx, kw_, kb = jax.random.split(key, 3)
    bound = 1.0 / (embedding ** 0.5)
    thetas_w = jax.random.uniform(kw_, (n_nodes, 2, embedding),
                                  minval=-bound, maxval=bound, dtype=jnp.float32)
    thetas_b = jax.random.uniform(kb, (n_nodes, 2),
                                  minval=-bound, maxval=bound, dtype=jnp.float32)
    x = jax.random.normal(kx, (batch, embedding), dtype=jnp.float32)

    tables = prepare_h_softmax(thetas_w, thetas_b, huffman_coding,
                               tn=kw.pop("tn", 256), tc=kw.pop("tc", 512))
    out = h_softmax(x, tables, **kw)
    out = jax.block_until_ready(out)

    ref = reference_h_softmax(x, thetas_w, thetas_b, huffman_coding)
    assert out.shape == (batch, n_classes), (out.shape, batch, n_classes)
    out64 = np.asarray(out, np.float64)
    err = float(np.max(np.abs(out64 - ref)))
    # bf16 MXU operands -> compare against the fp64 reference with loosened tolerance.
    assert np.allclose(out64, ref, atol=2e-2, rtol=2e-2), (name, err)
    return err


if __name__ == "__main__":
    key = jax.random.PRNGKey(0)
    k1, k2 = jax.random.split(key)

    # Case 1: tiny skewed Huffman tree (4 classes, 3 internal nodes), default (clamped)
    # tile sizes -> single nonzero tile, init & finalize on the same grid step.
    huffman_small = [
        [(0, 0)],
        [(0, 1), (1, 0)],
        [(0, 1), (1, 1), (2, 0)],
        [(0, 1), (1, 1), (2, 1)],
    ]
    _run_case("small", k1, huffman_small, n_nodes=3, batch=8, embedding=32)

    # Case 2: 256-class balanced prefix tree (255 internal nodes) with tn=tc=128 and
    # tb=16 (batch 32 -> 2 batch tiles).  Depth-first node numbering makes the
    # (node-tile 1, class-tile 0) selection block empty, so the compacted tile list
    # has 3 of 4 blocks: exercises skipped DMA, the multi-node-tile accumulation run
    # for class tile 1, and multiple batch tiles.
    huffman_big, n_nodes_big = _balanced_prefix_codes(256)
    _run_case("balanced256", k2, huffman_big, n_nodes_big, batch=32, embedding=32,
              tn=128, tc=128, tb=16)

    print("KERNEL_OK")
</pallas_src>

<mosaic_0001>
module attributes {stable_mosaic.version = 11 : i64} {
  func.func @_logit_kernel(%arg0: i32, %arg1: i32, %arg2: memref<16x256xbf16, #tpu.memory_space<vmem>>, %arg3: memref<256x128xbf16, #tpu.memory_space<vmem>>, %arg4: memref<1x16x256xbf16, #tpu.memory_space<vmem>>) attributes {dimension_semantics = [#tpu.dimension_semantics<parallel>, #tpu.dimension_semantics<parallel>], iteration_bounds = array<i64: 1, 1>, scalar_prefetch = 0 : i64, scratch_operands = 0 : i64, tpu.core_type = #tpu.core_type<tc>, window_params = [{transform_indices = @transform_0, window_bounds = array<i64: 16, 256>}, {transform_indices = @transform_1, window_bounds = array<i64: 256, 128>}, {transform_indices = @transform_2, window_bounds = array<i64: 1, 16, 256>}]} {
    %c0 = arith.constant 0 : index
    %c0_0 = arith.constant 0 : index
    %0 = vector.load %arg2[%c0, %c0_0] : memref<16x256xbf16, #tpu.memory_space<vmem>>, vector<16x256xbf16>
    %c0_1 = arith.constant 0 : index
    %c0_2 = arith.constant 0 : index
    %1 = vector.load %arg3[%c0_1, %c0_2] : memref<256x128xbf16, #tpu.memory_space<vmem>>, vector<256x128xbf16>
    %cst = arith.constant dense<0.000000e+00> : vector<16x128xf32>
    %2 = tpu.matmul %0, %1, %cst {dimension_numbers = #tpu.dot_dimension_numbers<[1], [0], [0], [1], [0, 0, 1, 1], [], []>} : vector<16x256xbf16>, vector<256x128xbf16>, vector<16x128xf32> -> vector<16x128xf32>
    %cst_3 = arith.constant 0.000000e+00 : f32
    %3 = vector.broadcast %cst_3 : f32 to vector<16x128xf32>
    %4 = arith.maximumf %2, %3 : vector<16x128xf32>
    %5 = math.absf %2 : vector<16x128xf32>
    %cst_4 = arith.constant 0.000000e+00 : f32
    %6 = vector.broadcast %cst_4 : f32 to vector<16x128xf32>
    %7 = arith.subf %6, %5 : vector<16x128xf32>
    %8 = math.exp %7 : vector<16x128xf32>
    %9 = math.log1p %8 : vector<16x128xf32>
    %10 = arith.addf %4, %9 : vector<16x128xf32>
    %cst_5 = arith.constant 0.000000e+00 : f32
    %11 = vector.broadcast %cst_5 : f32 to vector<16x128xf32>
    %12 = arith.subf %11, %10 : vector<16x128xf32>
    %13 = arith.truncf %12 : vector<16x128xf32> to vector<16x128xbf16>
    %c0_6 = arith.constant 0 : index
    %c0_7 = arith.constant 0 : index
    %c0_8 = arith.constant 0 : index
    %14 = vector.load %arg4[%c0_6, %c0_7, %c0_8] : memref<1x16x256xbf16, #tpu.memory_space<vmem>>, vector<1x16x128xbf16>
    %15 = vector.shape_cast %14 : vector<1x16x128xbf16> to vector<16x128xbf16>
    %16 = vector.shape_cast %13 : vector<16x128xbf16> to vector<1x16x128xbf16>
    tpu.vector_store %arg4[%c0_6, %c0_7, %c0_8], %16 {strides = array<i32>} : memref<1x16x256xbf16, #tpu.memory_space<vmem>>, vector<1x16x128xbf16>,
    %17 = arith.truncf %2 : vector<16x128xf32> to vector<16x128xbf16>
    %c0_9 = arith.constant 0 : index
    %c0_10 = arith.constant 0 : index
    %c128 = arith.constant 128 : index
    %18 = vector.load %arg4[%c0_9, %c0_10, %c128] : memref<1x16x256xbf16, #tpu.memory_space<vmem>>, vector<1x16x128xbf16>
    %19 = vector.shape_cast %18 : vector<1x16x128xbf16> to vector<16x128xbf16>
    %20 = vector.shape_cast %17 : vector<16x128xbf16> to vector<1x16x128xbf16>
    tpu.vector_store %arg4[%c0_9, %c0_10, %c128], %20 {strides = array<i32>} : memref<1x16x256xbf16, #tpu.memory_space<vmem>>, vector<1x16x128xbf16>,
    return
  }
  func.func @transform_0(%arg0: i32, %arg1: i32) -> (i32, i32) {
    %c0_i32 = arith.constant 0 : i32
    %c0_i32_0 = arith.constant 0 : i32
    return %arg0, %c0_i32 : i32, i32
  }
  func.func @transform_1(%arg0: i32, %arg1: i32) -> (i32, i32) {
    %c0_i32 = arith.constant 0 : i32
    %c0_i32_0 = arith.constant 0 : i32
    return %c0_i32, %arg1 : i32, i32
  }
  func.func @transform_2(%arg0: i32, %arg1: i32) -> (i32, i32, i32) {
    %c0_i32 = arith.constant 0 : i32
    %c0_i32_0 = arith.constant 0 : i32
    return %arg1, %arg0, %c0_i32 : i32, i32, i32
  }
}

</mosaic_0001>

<llo_original>
// kernel: tpu_custom_call.1
$region0: #{tpu_custom_call.1}
  #allocation0 [shape = 'u32[]', space=smem, size = 0x4, offset = 0x4, fixed_abs, tag = 'smem constant byte address 0x4 - core index']
  #allocation1 [shape = 'u32[144,128]{1,0:T(1,128)}', space=vmem, size = 0x12000, scoped, tag = 'internal scratch']
  %s0 = inlined_call_operand.hbm [shape: bf16[16,256], index: 0, kind: input, shape index: {}]
  %s1 = inlined_call_operand.hbm [shape: bf16[256,128], index: 1, kind: input, shape index: {}]
  %s2 = inlined_call_operand.hbm [shape: bf16[1,16,256], index: 2, kind: output, shape index: {}]
  %s3 = sld [smem:[#allocation0]]
  $region26: #{tpu_custom_call.1} parent=0
    _
  %s5 = ssub.s32 1, %s3
  %s6 = scalar_select 0, %s5, %s3
  $region1: #{tpu_custom_call.1} parent=0
    #allocation2 [shape = 'u8[8192]{0}', space=vmem, size = 0x2000, scoped, tag = 'input window, operand 0, single buffered']
    #allocation3 [shape = 's32[1]{0}', space=sflag, size = 0x4, scoped, tag = 'scoped memory for tpu_custom_call.1']
    #allocation4 [shape = 's32[1]{0}', space=sflag, size = 0x4, scoped, tag = 'scoped memory for tpu_custom_call.1']
    #allocation5 [shape = 'u8[65536]{0}', space=vmem, size = 0x10000, scoped, tag = 'input window, operand 1, single buffered']
    #allocation6 [shape = 's32[1]{0}', space=sflag, size = 0x4, scoped, tag = 'scoped memory for tpu_custom_call.1']
    #allocation7 [shape = 'u8[8192]{0}', space=vmem, size = 0x2000, scoped, tag = 'output window, operand 0, single buffered']
    %7 = vsyncpa [#allocation3], 0
    %8 = vsyncpa [#allocation6], 0
    %9 = vsyncpa [#allocation4], 0
    // Predicated region
    $region2: #{tpu_custom_call.1} parent=1 // pred_check
      _
    $region3: #{tpu_custom_call.1} parent=1 // pred_check_branch
      %11 = sbr.rel (0) target = $region5
    $region4: #{tpu_custom_call.1} parent=1 // pred_region
      %s13 = ssub.s32 256, 256
      %14 = vsyncadd [#allocation3], %s13
      %s15 = sshll.u32 [#allocation2], 4
      %s16 = int_to_ptr.vmem [resolvable:$true] %s15
      %21 = dma.hbm_to_vmem [thread:$0]  %s0, 256, %s16, [#allocation3], 128, 128, 8
    $region5: #{tpu_custom_call.1} parent=1 // pred_fallthru
      _
    // Predicated region
    $region6: #{tpu_custom_call.1} parent=1 // pred_check
      _
    $region7: #{tpu_custom_call.1} parent=1 // pred_check_branch
      %23 = sbr.rel (0) target = $region9
    $region8: #{tpu_custom_call.1} parent=1 // pred_region
      %s25 = ssub.s32 2048, 2048
      %26 = vsyncadd [#allocation6], %s25
      %s27 = sshll.u32 [#allocation5], 4
      %s28 = int_to_ptr.vmem [resolvable:$true] %s27
      %33 = dma.hbm_to_vmem [thread:$0]  %s1, 2048, %s28, [#allocation6], 64, 64, 4
    $region9: #{tpu_custom_call.1} parent=1 // pred_fallthru
      _
    // Predicated region
    $region10: #{tpu_custom_call.1} parent=1 // pred_check
      _
    $region11: #{tpu_custom_call.1} parent=1 // pred_check_branch
      %35 = sbr.rel (0) target = $region13
    $region12: #{tpu_custom_call.1} parent=1 // pred_region
      %36 = dma.done [#allocation3], 256
    $region13: #{tpu_custom_call.1} parent=1 // pred_fallthru
      _
    // Predicated region
    $region14: #{tpu_custom_call.1} parent=1 // pred_check
      _
    $region15: #{tpu_custom_call.1} parent=1 // pred_check_branch
      %38 = sbr.rel (0) target = $region17
    $region16: #{tpu_custom_call.1} parent=1 // pred_region
      %39 = dma.done [#allocation6], 2048
    $region17: #{tpu_custom_call.1} parent=1 // pred_fallthru
      _
    %v41 = vld [vmem:[#allocation2] sm:$0xff]
    %v42 = vld [vmem:[#allocation2 + $0x8] sm:$0xff]
    %v43 = vld [vmem:[#allocation5] sm:$0xf]
    %v44 = vld [vmem:[#allocation5 + $0x4] sm:$0xf]
    %v45 = vld [vmem:[#allocation5 + $0x8] sm:$0xf]
    %v46 = vld [vmem:[#allocation5 + $0xc] sm:$0xf]
    %v47 = vld [vmem:[#allocation5 + $0x10] sm:$0xf]
    %v48 = vld [vmem:[#allocation5 + $0x14] sm:$0xf]
    %v49 = vld [vmem:[#allocation5 + $0x18] sm:$0xf]
    %v50 = vld [vmem:[#allocation5 + $0x1c] sm:$0xf]
    %v51 = vld [vmem:[#allocation5 + $0x20] sm:$0xf]
    %v52 = vld [vmem:[#allocation5 + $0x24] sm:$0xf]
    %v53 = vld [vmem:[#allocation5 + $0x28] sm:$0xf]
    %v54 = vld [vmem:[#allocation5 + $0x2c] sm:$0xf]
    %v55 = vld [vmem:[#allocation5 + $0x30] sm:$0xf]
    %v56 = vld [vmem:[#allocation5 + $0x34] sm:$0xf]
    %v57 = vld [vmem:[#allocation5 + $0x38] sm:$0xf]
    %v58 = vld [vmem:[#allocation5 + $0x3c] sm:$0xf]
    %v59 = vld [vmem:[#allocation5 + $0x40] sm:$0xf]
    %v60 = vld [vmem:[#allocation5 + $0x44] sm:$0xf]
    %v61 = vld [vmem:[#allocation5 + $0x48] sm:$0xf]
    %v62 = vld [vmem:[#allocation5 + $0x4c] sm:$0xf]
    %v63 = vld [vmem:[#allocation5 + $0x50] sm:$0xf]
    %v64 = vld [vmem:[#allocation5 + $0x54] sm:$0xf]
    %v65 = vld [vmem:[#allocation5 + $0x58] sm:$0xf]
    %v66 = vld [vmem:[#allocation5 + $0x5c] sm:$0xf]
    %v67 = vld [vmem:[#allocation5 + $0x60] sm:$0xf]
    %v68 = vld [vmem:[#allocation5 + $0x64] sm:$0xf]
    %v69 = vld [vmem:[#allocation5 + $0x68] sm:$0xf]
    %v70 = vld [vmem:[#allocation5 + $0x6c] sm:$0xf]
    %v71 = vld [vmem:[#allocation5 + $0x70] sm:$0xf]
    %v72 = vld [vmem:[#allocation5 + $0x74] sm:$0xf]
    %v73 = vld [vmem:[#allocation5 + $0x78] sm:$0xf]
    %v74 = vld [vmem:[#allocation5 + $0x7c] sm:$0xf]
    %v77 = vunpack.c.l.b16 %v41
    %v78 = vunpack.c.h.b16 %v41
    %v79 = vunpack.c.l.b16 %v42
    %v80 = vunpack.c.h.b16 %v42
    %v81 = vpack.c.b16 %v79, %v77
    %v82 = vpack.c.b16 %v80, %v78
    %v117 = vunpack.c.l.b16 %v43
    %v118 = vunpack.c.l.b16 %v44
    %v119 = vunpack.c.l.b16 %v45
    %v120 = vunpack.c.l.b16 %v46
    %v121 = vunpack.c.l.b16 %v47
    %v122 = vunpack.c.l.b16 %v48
    %v123 = vunpack.c.l.b16 %v49
    %v124 = vunpack.c.l.b16 %v50
    %v125 = vunpack.c.l.b16 %v51
    %v126 = vunpack.c.l.b16 %v52
    %v127 = vunpack.c.l.b16 %v53
    %v128 = vunpack.c.l.b16 %v54
    %v129 = vunpack.c.l.b16 %v55
    %v130 = vunpack.c.l.b16 %v56
    %v131 = vunpack.c.l.b16 %v57
    %v132 = vunpack.c.l.b16 %v58
    %v133 = vunpack.c.l.b16 %v59
    %v134 = vunpack.c.l.b16 %v60
    %v135 = vunpack.c.l.b16 %v61
    %v136 = vunpack.c.l.b16 %v62
    %v137 = vunpack.c.l.b16 %v63
    %v138 = vunpack.c.l.b16 %v64
    %v139 = vunpack.c.l.b16 %v65
    %v140 = vunpack.c.l.b16 %v66
    %v141 = vunpack.c.l.b16 %v67
    %v142 = vunpack.c.l.b16 %v68
    %v143 = vunpack.c.l.b16 %v69
    %v144 = vunpack.c.l.b16 %v70
    %v145 = vunpack.c.l.b16 %v71
    %v146 = vunpack.c.l.b16 %v72
    %v147 = vunpack.c.l.b16 %v73
    %v148 = vunpack.c.l.b16 %v74
    %v149 = vpack.c.b16 %v118, %v117
    %v150 = vpack.c.b16 %v120, %v119
    %v151 = vpack.c.b16 %v122, %v121
    %v152 = vpack.c.b16 %v124, %v123
    %v153 = vpack.c.b16 %v126, %v125
    %v154 = vpack.c.b16 %v128, %v127
    %v155 = vpack.c.b16 %v130, %v129
    %v156 = vpack.c.b16 %v132, %v131
    %v157 = vpack.c.b16 %v134, %v133
    %v158 = vpack.c.b16 %v136, %v135
    %v159 = vpack.c.b16 %v138, %v137
    %v160 = vpack.c.b16 %v140, %v139
    %v161 = vpack.c.b16 %v142, %v141
    %v162 = vpack.c.b16 %v144, %v143
    %v163 = vpack.c.b16 %v146, %v145
    %v164 = vpack.c.b16 %v148, %v147
    %181 = vmatprep.subr.bf16.mxu0 0
    %182 = vmatpush1.bf16.msra.mxu0 %v149
    %183 = vmatprep.subr.bf16.mxu0 0
    %184 = vmatpush1.bf16.msra.mxu0 %v150
    %185 = vmatprep.subr.bf16.mxu0 0
    %186 = vmatpush1.bf16.msra.mxu0 %v151
    %187 = vmatprep.subr.bf16.mxu0 0
    %188 = vmatpush1.bf16.msra.mxu0 %v152
    %189 = vmatprep.subr.bf16.mxu0 0
    %190 = vmatpush1.bf16.msra.mxu0 %v153
    %191 = vmatprep.subr.bf16.mxu0 0
    %192 = vmatpush1.bf16.msra.mxu0 %v154
    %193 = vmatprep.subr.bf16.mxu0 0
    %194 = vmatpush1.bf16.msra.mxu0 %v155
    %195 = vmatprep.subr.bf16.mxu0 0
    %196 = vmatpush1.bf16.msra.mxu0 %v156
    %197 = vmatprep.subr.bf16.mxu0 0
    %198 = vmatpush1.bf16.msra.mxu0 %v157
    %199 = vmatprep.subr.bf16.mxu0 0
    %200 = vmatpush1.bf16.msra.mxu0 %v158
    %201 = vmatprep.subr.bf16.mxu0 0
    %202 = vmatpush1.bf16.msra.mxu0 %v159
    %203 = vmatprep.subr.bf16.mxu0 0
    %204 = vmatpush1.bf16.msra.mxu0 %v160
    %205 = vmatprep.subr.bf16.mxu0 0
    %206 = vmatpush1.bf16.msra.mxu0 %v161
    %207 = vmatprep.subr.bf16.mxu0 0
    %208 = vmatpush1.bf16.msra.mxu0 %v162
    %209 = vmatprep.subr.bf16.mxu0 0
    %210 = vmatpush1.bf16.msra.mxu0 %v163
    %211 = vmatprep.subr.bf16.mxu0 0
    %212 = vmatpush1.bf16.msra.mxu0 %v164
    %213 = vmatprep.mubr.bf16.mxu0 %v82
    %214 = vmatmul.mubr.bf16.gmra.mrb[0].mxu0 %v81
    %v215 = vpop.f32.mrb[0].mxu0
    %v216 = vadd.f32 0.0, %v215
    %v217 = vpop.f32.mrb[0].mxu0
    %v218 = vpop.f32.mrb[0].mxu0
    %v219 = vadd.f32 0.0, %v218
    %v220 = vpop.f32.mrb[0].mxu0
    %221 = vdwg.mxu0
    %v222 = vmax.f32 %v216, 0.0
    %v223 = vmax.f32 %v219, 0.0
    %v224 = vand.u32 2147483647, %v216
    %v225 = vand.u32 2147483647, %v219
    %v226 = vsub.f32 0.0, %v224
    %v227 = vsub.f32 0.0, %v225
    %v228 = vmul.f32 %v226, 1.442695
    %v229 = vpow.pop %v228
    %v230 = vmul.f32 %v227, 1.442695
    %v231 = vpow.pop %v230
    %v232 = vadd.f32 %v229, 1.0
    %v233 = vlog2.pop %v232
    %v234 = vmul.f32 %v233, 0.6931472
    %v235 = vmul.f32 -0.5, %v229
    %v236 = vadd.f32 %v235, 1.0
    %v237 = vmul.f32 %v236, %v229
    %v238 = vand.u32 2147483647, %v229
    %vm239 = vcmp.lt.f32.partialorder %v238, 0.0004427343
    %v240 = vsel %vm239, %v237, %v234
    %v241 = vadd.f32 %v231, 1.0
    %v242 = vlog2.pop %v241
    %v243 = vmul.f32 %v242, 0.6931472
    %v244 = vmul.f32 -0.5, %v231
    %v245 = vadd.f32 %v244, 1.0
    %v246 = vmul.f32 %v245, %v231
    %v247 = vand.u32 2147483647, %v231
    %vm248 = vcmp.lt.f32.partialorder %v247, 0.0004427343
    %v249 = vsel %vm248, %v246, %v243
    %v250 = vadd.f32 %v222, %v240
    %v251 = vadd.f32 %v223, %v249
    %v252 = vsub.f32 0.0, %v250
    %v253 = vsub.f32 0.0, %v251
    %v254 = vpack.c.bf16 %v253, %v252
    %v256 = vunpack.c.l.b16 %v254
    %v257 = vunpack.c.h.b16 %v254
    %v258 = vpack.c.b16 %v256, %v256
    %v259 = vpack.c.b16 %v257, %v257
    %262 = vst [vmem:[#allocation7] sm:$0xf] %v258
    %263 = vst [vmem:[#allocation7 + $0x8] sm:$0xf] %v259
    %v264 = vpack.c.bf16 %v219, %v216
    %v266 = vunpack.c.l.b16 %v264
    %v267 = vunpack.c.h.b16 %v264
    %v268 = vpack.c.b16 %v266, %v266
    %v269 = vpack.c.b16 %v267, %v267
    %272 = vst [vmem:[#allocation7 + $0x4] sm:$0xf] %v268
    %273 = vst [vmem:[#allocation7 + $0xc] sm:$0xf] %v269
    // Predicated region
    $region18: #{tpu_custom_call.1} parent=1 // pred_check
      _
    $region19: #{tpu_custom_call.1} parent=1 // pred_check_branch
      %275 = sbr.rel (0) target = $region21
    $region20: #{tpu_custom_call.1} parent=1 // pred_region
      %s277 = ssub.s32 256, 256
      %278 = vsyncadd [#allocation4], %s277
      %s279 = sshll.u32 [#allocation7], 4
      %s280 = int_to_ptr.vmem [resolvable:$true] %s279
      %285 = dma.vmem_to_hbm [thread:$0]  %s280, 256, %s2, [#allocation4], 128, 128, 8
    $region21: #{tpu_custom_call.1} parent=1 // pred_fallthru
      _
    // Predicated region
    $region22: #{tpu_custom_call.1} parent=1 // pred_check
      _
    $region23: #{tpu_custom_call.1} parent=1 // pred_check_branch
      %287 = sbr.rel (0) target = $region25
    $region24: #{tpu_custom_call.1} parent=1 // pred_region
      %288 = dma.done [#allocation4], 256
    $region25: #{tpu_custom_call.1} parent=1 // pred_fallthru
      _
    %289 = vsyncpa [#allocation3], 1
    %290 = vsyncpa [#allocation6], 1
    %291 = vsyncpa [#allocation4], 1

</llo_original>
